<compile_context>
chip_gen: v7x
topology: tpu7x:2x2x1
jax: 0.10.0
libtpu: 0.0.40
codegen_flags: <defaults>
</compile_context>

<pallas_src>
import functools

import jax
import jax.numpy as jnp
from jax.experimental import pallas as pl
from jax.experimental.pallas import tpu as pltpu

O_PAD = 128  # lane-dense padded output width (real outputs live in cols [0, 4))


def _bbox_regressor_kernel(x_ref, w1_ref, b1_ref, w2_ref, b2_ref, o_ref):
    # x:  (TB, 512) f32    w1: (512, 256) bf16   b1: (1, 256) f32
    # w2: (256, 128) bf16  b2: (1, 128) f32      o : (TB, 128) bf16 (cols>=4 are 0)
    x = x_ref[...].astype(jnp.bfloat16)
    # Layer 1: Linear + ReLU (bf16 operands, f32 accumulation on the MXU).
    h = jnp.dot(x, w1_ref[...], preferred_element_type=jnp.float32)
    h = jnp.maximum(h + b1_ref[...], 0.0)
    # Dropout(p=0.5): identity in eval mode.
    # Layer 2: Linear -> padded 128-lane output (only first 4 lanes meaningful).
    y = jnp.dot(h.astype(jnp.bfloat16), w2_ref[...],
                preferred_element_type=jnp.float32)
    y = y + b2_ref[...]
    o_ref[...] = y.astype(o_ref.dtype)


def prepare_params(w1, b1, w2, b2):
    """One-time (init-time) param prep: bf16 weights, 2-D biases, lane-padded W2/b2."""
    H = w1.shape[1]
    O = w2.shape[1]
    w1_bf = w1.astype(jnp.bfloat16)
    b1_2d = b1.reshape(1, H).astype(jnp.float32)
    w2_p = jnp.zeros((H, O_PAD), jnp.bfloat16).at[:, :O].set(w2.astype(jnp.bfloat16))
    b2_p = jnp.zeros((1, O_PAD), jnp.float32).at[0, :O].set(b2.astype(jnp.float32))
    return w1_bf, b1_2d, w2_p, b2_p


@functools.partial(jax.jit, static_argnames=("out_dim", "tb"))
def bbox_regressor(features, w1_bf, b1_2d, w2_p, b2_p, *, out_dim=4, tb=2048):
    """features: (B, input_dim) f32 -> (B, out_dim) f32."""
    B, D = features.shape
    H = w1_bf.shape[1]

    # Batch tile: multiple of 8 sublanes; no host-side padding — the ragged
    # last block is handled by Pallas (rows are independent).
    TB = min(tb, B)
    TB = max(8, ((TB + 7) // 8) * 8)
    grid = (pl.cdiv(B, TB),)

    out = pl.pallas_call(
        _bbox_regressor_kernel,
        out_shape=jax.ShapeDtypeStruct((B, O_PAD), jnp.bfloat16),
        grid_spec=pl.GridSpec(
            grid=grid,
            in_specs=[
                pl.BlockSpec((TB, D), lambda i: (i, 0)),      # x: streamed over batch
                pl.BlockSpec((D, H), lambda i: (0, 0)),       # w1 (bf16): VMEM-resident
                pl.BlockSpec((1, H), lambda i: (0, 0)),       # b1: VMEM-resident
                pl.BlockSpec((H, O_PAD), lambda i: (0, 0)),   # w2 (bf16, padded): resident
                pl.BlockSpec((1, O_PAD), lambda i: (0, 0)),   # b2 (padded): resident
            ],
            out_specs=pl.BlockSpec((TB, O_PAD), lambda i: (i, 0)),
        ),
        compiler_params=pltpu.CompilerParams(
            dimension_semantics=("parallel",),   # shard batch tiles across TCs (v7x)
            vmem_limit_bytes=32 * 1024 * 1024,
        ),
    )(features, w1_bf, b1_2d, w2_p, b2_p)

    # Slice the real columns and upcast back to the feature dtype (fused under jit).
    return out[:, :out_dim].astype(features.dtype)


def _reference(features, w1, b1, w2, b2):
    h = jnp.maximum(features @ w1 + b1, 0.0)
    return h @ w2 + b2


if __name__ == "__main__":
    INPUT_DIM = 512
    HIDDEN = 256
    OUT = 4
    BATCH = 8

    key = jax.random.PRNGKey(0)
    kx, kw1, kb1, kw2, kb2 = jax.random.split(key, 5)

    # Deterministic, PyTorch-Linear-style uniform init (scaled by 1/sqrt(fan_in)).
    features = jax.random.normal(kx, (BATCH, INPUT_DIM), dtype=jnp.float32)
    lim1 = 1.0 / jnp.sqrt(INPUT_DIM)
    lim2 = 1.0 / jnp.sqrt(HIDDEN)
    w1 = jax.random.uniform(kw1, (INPUT_DIM, HIDDEN), jnp.float32, -lim1, lim1)
    b1 = jax.random.uniform(kb1, (HIDDEN,), jnp.float32, -lim1, lim1)
    w2 = jax.random.uniform(kw2, (HIDDEN, OUT), jnp.float32, -lim2, lim2)
    b2 = jax.random.uniform(kb2, (OUT,), jnp.float32, -lim2, lim2)

    params = prepare_params(w1, b1, w2, b2)
    out = bbox_regressor(features, *params, out_dim=OUT)
    out = jax.block_until_ready(out)

    ref = _reference(features, w1, b1, w2, b2)
    assert out.shape == (BATCH, OUT), out.shape
    # Tolerance loosened vs. the f32 reference: bf16 MXU operands (K=512) and
    # the bf16 output store introduce ~1e-3-level error.
    assert jnp.allclose(out, ref, atol=2e-2, rtol=2e-2), "mismatch vs reference"

    print("KERNEL_OK")
</pallas_src>

<mosaic_0001>
module attributes {stable_mosaic.version = 11 : i64} {
  func.func @_bbox_regressor_kernel(%arg0: i32, %arg1: memref<8x512xf32, #tpu.memory_space<vmem>>, %arg2: memref<512x256xbf16, #tpu.memory_space<vmem>>, %arg3: memref<1x256xf32, #tpu.memory_space<vmem>>, %arg4: memref<256x128xbf16, #tpu.memory_space<vmem>>, %arg5: memref<1x128xf32, #tpu.memory_space<vmem>>, %arg6: memref<8x128xbf16, #tpu.memory_space<vmem>>) attributes {dimension_semantics = [#tpu.dimension_semantics<parallel>], iteration_bounds = array<i64: 1>, scalar_prefetch = 0 : i64, scratch_operands = 0 : i64, tpu.core_type = #tpu.core_type<tc>, window_params = [{transform_indices = @transform_0, window_bounds = array<i64: 8, 512>}, {pipeline_mode = #tpu.pipeline_mode<synchronous>, transform_indices = @transform_1, window_bounds = array<i64: 512, 256>}, {pipeline_mode = #tpu.pipeline_mode<synchronous>, transform_indices = @transform_2, window_bounds = array<i64: 1, 256>}, {pipeline_mode = #tpu.pipeline_mode<synchronous>, transform_indices = @transform_3, window_bounds = array<i64: 256, 128>}, {pipeline_mode = #tpu.pipeline_mode<synchronous>, transform_indices = @transform_4, window_bounds = array<i64: 1, 128>}, {transform_indices = @transform_5, window_bounds = array<i64: 8, 128>}]} {
    %c0 = arith.constant 0 : index
    %c0_0 = arith.constant 0 : index
    %0 = vector.load %arg1[%c0, %c0_0] : memref<8x512xf32, #tpu.memory_space<vmem>>, vector<8x512xf32>
    %1 = arith.truncf %0 : vector<8x512xf32> to vector<8x512xbf16>
    %c0_1 = arith.constant 0 : index
    %c0_2 = arith.constant 0 : index
    %2 = vector.load %arg2[%c0_1, %c0_2] : memref<512x256xbf16, #tpu.memory_space<vmem>>, vector<512x256xbf16>
    %cst = arith.constant dense<0.000000e+00> : vector<8x256xf32>
    %3 = tpu.matmul %1, %2, %cst {dimension_numbers = #tpu.dot_dimension_numbers<[1], [0], [0], [1], [0, 0, 1, 1], [], []>} : vector<8x512xbf16>, vector<512x256xbf16>, vector<8x256xf32> -> vector<8x256xf32>
    %c0_3 = arith.constant 0 : index
    %c0_4 = arith.constant 0 : index
    %4 = vector.load %arg3[%c0_3, %c0_4] : memref<1x256xf32, #tpu.memory_space<vmem>>, vector<1x256xf32>
    %5 = vector.broadcast %4 : vector<1x256xf32> to vector<8x256xf32>
    %6 = arith.addf %3, %5 : vector<8x256xf32>
    %cst_5 = arith.constant 0.000000e+00 : f32
    %7 = vector.broadcast %cst_5 : f32 to vector<8x256xf32>
    %8 = arith.maximumf %6, %7 : vector<8x256xf32>
    %9 = arith.truncf %8 : vector<8x256xf32> to vector<8x256xbf16>
    %c0_6 = arith.constant 0 : index
    %c0_7 = arith.constant 0 : index
    %10 = vector.load %arg4[%c0_6, %c0_7] : memref<256x128xbf16, #tpu.memory_space<vmem>>, vector<256x128xbf16>
    %cst_8 = arith.constant dense<0.000000e+00> : vector<8x128xf32>
    %11 = tpu.matmul %9, %10, %cst_8 {dimension_numbers = #tpu.dot_dimension_numbers<[1], [0], [0], [1], [0, 0, 1, 1], [], []>} : vector<8x256xbf16>, vector<256x128xbf16>, vector<8x128xf32> -> vector<8x128xf32>
    %c0_9 = arith.constant 0 : index
    %c0_10 = arith.constant 0 : index
    %12 = vector.load %arg5[%c0_9, %c0_10] : memref<1x128xf32, #tpu.memory_space<vmem>>, vector<1x128xf32>
    %13 = vector.broadcast %12 : vector<1x128xf32> to vector<8x128xf32>
    %14 = arith.addf %11, %13 : vector<8x128xf32>
    %15 = arith.truncf %14 : vector<8x128xf32> to vector<8x128xbf16>
    %c0_11 = arith.constant 0 : index
    %c0_12 = arith.constant 0 : index
    %16 = vector.load %arg6[%c0_11, %c0_12] : memref<8x128xbf16, #tpu.memory_space<vmem>>, vector<8x128xbf16>
    tpu.vector_store %arg6[%c0_11, %c0_12], %15 {strides = array<i32>} : memref<8x128xbf16, #tpu.memory_space<vmem>>, vector<8x128xbf16>,
    return
  }
  func.func @transform_0(%arg0: i32) -> (i32, i32) {
    %c0_i32 = arith.constant 0 : i32
    %c0_i32_0 = arith.constant 0 : i32
    return %arg0, %c0_i32 : i32, i32
  }
  func.func @transform_1(%arg0: i32) -> (i32, i32) {
    %c0_i32 = arith.constant 0 : i32
    %c0_i32_0 = arith.constant 0 : i32
    %c0_i32_1 = arith.constant 0 : i32
    return %c0_i32, %c0_i32_0 : i32, i32
  }
  func.func @transform_2(%arg0: i32) -> (i32, i32) {
    %c0_i32 = arith.constant 0 : i32
    %c0_i32_0 = arith.constant 0 : i32
    %c0_i32_1 = arith.constant 0 : i32
    return %c0_i32, %c0_i32_0 : i32, i32
  }
  func.func @transform_3(%arg0: i32) -> (i32, i32) {
    %c0_i32 = arith.constant 0 : i32
    %c0_i32_0 = arith.constant 0 : i32
    %c0_i32_1 = arith.constant 0 : i32
    return %c0_i32, %c0_i32_0 : i32, i32
  }
  func.func @transform_4(%arg0: i32) -> (i32, i32) {
    %c0_i32 = arith.constant 0 : i32
    %c0_i32_0 = arith.constant 0 : i32
    %c0_i32_1 = arith.constant 0 : i32
    return %c0_i32, %c0_i32_0 : i32, i32
  }
  func.func @transform_5(%arg0: i32) -> (i32, i32) {
    %c0_i32 = arith.constant 0 : i32
    %c0_i32_0 = arith.constant 0 : i32
    return %arg0, %c0_i32 : i32, i32
  }
}

</mosaic_0001>

<llo_original>
// kernel: bbox_regressor.1
$region0: #{bbox_regressor.1}
  #allocation0 [shape = 'u32[]', space=smem, size = 0x4, offset = 0x4, fixed_abs, tag = 'smem constant byte address 0x4 - core index']
  #allocation1 [shape = 'u32[144,128]{1,0:T(1,128)}', space=vmem, size = 0x12000, scoped, tag = 'internal scratch']
  %s0 = inlined_call_operand.hbm [shape: f32[8,512], index: 0, kind: input, shape index: {}]
  %s1 = inlined_call_operand.hbm [shape: bf16[512,256], index: 1, kind: input, shape index: {}]
  %s2 = inlined_call_operand.vmem [shape: f32[1,256], index: 2, kind: input, shape index: {}]
  %s3 = inlined_call_operand.hbm [shape: bf16[256,128], index: 3, kind: input, shape index: {}]
  %s4 = inlined_call_operand.vmem [shape: f32[1,128], index: 4, kind: input, shape index: {}]
  %s5 = inlined_call_operand.vmem [shape: bf16[8,128], index: 5, kind: output, shape index: {}]
  %s6 = sld [smem:[#allocation0]]
  $region42: #{bbox_regressor.1} parent=0
    _
  %s8 = ssub.s32 1, %s6
  %s9 = scalar_select 0, %s8, %s6
  $region1: #{bbox_regressor.1} parent=0
    #allocation2 [shape = 'u8[16384]{0}', space=vmem, size = 0x4000, scoped, tag = 'input window, operand 0, single buffered']
    #allocation3 [shape = 's32[1]{0}', space=sflag, size = 0x4, scoped, tag = 'scoped memory for bbox_regressor.1']
    #allocation4 [shape = 'u8[262144]{0}', space=vmem, size = 0x40000, scoped, tag = 'input window, operand 1, single buffered']
    #allocation5 [shape = 's32[1]{0}', space=sflag, size = 0x4, scoped, tag = 'scoped memory for bbox_regressor.1']
    #allocation6 [shape = 'u8[65536]{0}', space=vmem, size = 0x10000, scoped, tag = 'input window, operand 3, single buffered']
    %10 = vsyncpa [#allocation3], 0
    %11 = vsyncpa [#allocation5], 0
    // Predicated region
    $region2: #{bbox_regressor.1} parent=1 // pred_check
      _
    $region3: #{bbox_regressor.1} parent=1 // pred_check_branch
      %13 = sbr.rel (0) target = $region5
    $region4: #{bbox_regressor.1} parent=1 // pred_region
      %s15 = ssub.s32 512, 512
      %16 = vsyncadd [#allocation3], %s15
      %s18 = sshll.u32 [#allocation2], 4
      %s19 = int_to_ptr.vmem [resolvable:$true] %s18
      %21 = dma.hbm_to_vmem [thread:$0]  %s0, 512, %s19, [#allocation3]
    $region5: #{bbox_regressor.1} parent=1 // pred_fallthru
      _
    // Predicated region
    $region6: #{bbox_regressor.1} parent=1 // pred_check
      _
    $region7: #{bbox_regressor.1} parent=1 // pred_check_branch
      %23 = sbr.rel (0) target = $region9
    $region8: #{bbox_regressor.1} parent=1 // pred_region
      %s25 = ssub.s32 8192, 8192
      %26 = vsyncadd [#allocation5], %s25
      %s27 = sshll.u32 [#allocation4], 4
      %s28 = int_to_ptr.vmem [resolvable:$true] %s27
      %33 = dma.hbm_to_vmem [thread:$0]  %s1, 8192, %s28, [#allocation5], 128, 128, 8
    $region9: #{bbox_regressor.1} parent=1 // pred_fallthru
      _
    // Predicated region
    $region10: #{bbox_regressor.1} parent=1 // pred_check
      _
    $region11: #{bbox_regressor.1} parent=1 // pred_check_branch
      %35 = sbr.rel (0) target = $region13
    $region12: #{bbox_regressor.1} parent=1 // pred_region
      _
    $region13: #{bbox_regressor.1} parent=1 // pred_fallthru
      _
    // Predicated region
    $region14: #{bbox_regressor.1} parent=1 // pred_check
      _
    $region15: #{bbox_regressor.1} parent=1 // pred_check_branch
      %37 = sbr.rel (0) target = $region17
    $region16: #{bbox_regressor.1} parent=1 // pred_region
      %s39 = ssub.s32 2048, 2048
      %40 = vsyncadd [#allocation5], %s39
      %s41 = sshll.u32 [#allocation6], 4
      %s42 = int_to_ptr.vmem [resolvable:$true] %s41
      %47 = dma.hbm_to_vmem [thread:$0]  %s3, 2048, %s42, [#allocation5], 64, 64, 4
    $region17: #{bbox_regressor.1} parent=1 // pred_fallthru
      _
    // Predicated region
    $region18: #{bbox_regressor.1} parent=1 // pred_check
      _
    $region19: #{bbox_regressor.1} parent=1 // pred_check_branch
      %49 = sbr.rel (0) target = $region21
    $region20: #{bbox_regressor.1} parent=1 // pred_region
      _
    $region21: #{bbox_regressor.1} parent=1 // pred_fallthru
      _
    // Predicated region
    $region22: #{bbox_regressor.1} parent=1 // pred_check
      _
    $region23: #{bbox_regressor.1} parent=1 // pred_check_branch
      %51 = sbr.rel (0) target = $region25
    $region24: #{bbox_regressor.1} parent=1 // pred_region
      %52 = dma.done [#allocation3], 512
    $region25: #{bbox_regressor.1} parent=1 // pred_fallthru
      _
    // Predicated region
    $region26: #{bbox_regressor.1} parent=1 // pred_check
      _
    $region27: #{bbox_regressor.1} parent=1 // pred_check_branch
      %54 = sbr.rel (0) target = $region29
    $region28: #{bbox_regressor.1} parent=1 // pred_region
      %55 = dma.done [#allocation5], 8192
    $region29: #{bbox_regressor.1} parent=1 // pred_fallthru
      _
    // Predicated region
    $region30: #{bbox_regressor.1} parent=1 // pred_check
      _
    $region31: #{bbox_regressor.1} parent=1 // pred_check_branch
      %57 = sbr.rel (0) target = $region33
    $region32: #{bbox_regressor.1} parent=1 // pred_region
      %58 = dma.done [#allocation5], 2048
    $region33: #{bbox_regressor.1} parent=1 // pred_fallthru
      _
    %v60 = vld [vmem:[#allocation2] sm:$0xff]
    %v61 = vld [vmem:[#allocation2 + $0x8] sm:$0xff]
    %v62 = vld [vmem:[#allocation2 + $0x10] sm:$0xff]
    %v63 = vld [vmem:[#allocation2 + $0x18] sm:$0xff]
    %v64 = vpack.c.bf16 %v60, %v60
    %v65 = vpack.c.bf16 %v61, %v61
    %v66 = vpack.c.bf16 %v62, %v62
    %v67 = vpack.c.bf16 %v63, %v63
    %v68 = vld [vmem:[#allocation4] sm:$0xff]
    %v69 = vld [vmem:[#allocation4 + $0x8] sm:$0xff]
    %v70 = vld [vmem:[#allocation4 + $0x10] sm:$0xff]
    %v71 = vld [vmem:[#allocation4 + $0x18] sm:$0xff]
    %v72 = vld [vmem:[#allocation4 + $0x20] sm:$0xff]
    %v73 = vld [vmem:[#allocation4 + $0x28] sm:$0xff]
    %v74 = vld [vmem:[#allocation4 + $0x30] sm:$0xff]
    %v75 = vld [vmem:[#allocation4 + $0x38] sm:$0xff]
    %v76 = vld [vmem:[#allocation4 + $0x40] sm:$0xff]
    %v77 = vld [vmem:[#allocation4 + $0x48] sm:$0xff]
    %v78 = vld [vmem:[#allocation4 + $0x50] sm:$0xff]
    %v79 = vld [vmem:[#allocation4 + $0x58] sm:$0xff]
    %v80 = vld [vmem:[#allocation4 + $0x60] sm:$0xff]
    %v81 = vld [vmem:[#allocation4 + $0x68] sm:$0xff]
    %v82 = vld [vmem:[#allocation4 + $0x70] sm:$0xff]
    %v83 = vld [vmem:[#allocation4 + $0x78] sm:$0xff]
    %v84 = vld [vmem:[#allocation4 + $0x80] sm:$0xff]
    %v85 = vld [vmem:[#allocation4 + $0x88] sm:$0xff]
    %v86 = vld [vmem:[#allocation4 + $0x90] sm:$0xff]
    %v87 = vld [vmem:[#allocation4 + $0x98] sm:$0xff]
    %v88 = vld [vmem:[#allocation4 + $0xa0] sm:$0xff]
    %v89 = vld [vmem:[#allocation4 + $0xa8] sm:$0xff]
    %v90 = vld [vmem:[#allocation4 + $0xb0] sm:$0xff]
    %v91 = vld [vmem:[#allocation4 + $0xb8] sm:$0xff]
    %v92 = vld [vmem:[#allocation4 + $0xc0] sm:$0xff]
    %v93 = vld [vmem:[#allocation4 + $0xc8] sm:$0xff]
    %v94 = vld [vmem:[#allocation4 + $0xd0] sm:$0xff]
    %v95 = vld [vmem:[#allocation4 + $0xd8] sm:$0xff]
    %v96 = vld [vmem:[#allocation4 + $0xe0] sm:$0xff]
    %v97 = vld [vmem:[#allocation4 + $0xe8] sm:$0xff]
    %v98 = vld [vmem:[#allocation4 + $0xf0] sm:$0xff]
    %v99 = vld [vmem:[#allocation4 + $0xf8] sm:$0xff]
    %v100 = vld [vmem:[#allocation4 + $0x100] sm:$0xff]
    %v101 = vld [vmem:[#allocation4 + $0x108] sm:$0xff]
    %v102 = vld [vmem:[#allocation4 + $0x110] sm:$0xff]
    %v103 = vld [vmem:[#allocation4 + $0x118] sm:$0xff]
    %v104 = vld [vmem:[#allocation4 + $0x120] sm:$0xff]
    %v105 = vld [vmem:[#allocation4 + $0x128] sm:$0xff]
    %v106 = vld [vmem:[#allocation4 + $0x130] sm:$0xff]
    %v107 = vld [vmem:[#allocation4 + $0x138] sm:$0xff]
    %v108 = vld [vmem:[#allocation4 + $0x140] sm:$0xff]
    %v109 = vld [vmem:[#allocation4 + $0x148] sm:$0xff]
    %v110 = vld [vmem:[#allocation4 + $0x150] sm:$0xff]
    %v111 = vld [vmem:[#allocation4 + $0x158] sm:$0xff]
    %v112 = vld [vmem:[#allocation4 + $0x160] sm:$0xff]
    %v113 = vld [vmem:[#allocation4 + $0x168] sm:$0xff]
    %v114 = vld [vmem:[#allocation4 + $0x170] sm:$0xff]
    %v115 = vld [vmem:[#allocation4 + $0x178] sm:$0xff]
    %v116 = vld [vmem:[#allocation4 + $0x180] sm:$0xff]
    %v117 = vld [vmem:[#allocation4 + $0x188] sm:$0xff]
    %v118 = vld [vmem:[#allocation4 + $0x190] sm:$0xff]
    %v119 = vld [vmem:[#allocation4 + $0x198] sm:$0xff]
    %v120 = vld [vmem:[#allocation4 + $0x1a0] sm:$0xff]
    %v121 = vld [vmem:[#allocation4 + $0x1a8] sm:$0xff]
    %v122 = vld [vmem:[#allocation4 + $0x1b0] sm:$0xff]
    %v123 = vld [vmem:[#allocation4 + $0x1b8] sm:$0xff]
    %v124 = vld [vmem:[#allocation4 + $0x1c0] sm:$0xff]
    %v125 = vld [vmem:[#allocation4 + $0x1c8] sm:$0xff]
    %v126 = vld [vmem:[#allocation4 + $0x1d0] sm:$0xff]
    %v127 = vld [vmem:[#allocation4 + $0x1d8] sm:$0xff]
    %v128 = vld [vmem:[#allocation4 + $0x1e0] sm:$0xff]
    %v129 = vld [vmem:[#allocation4 + $0x1e8] sm:$0xff]
    %v130 = vld [vmem:[#allocation4 + $0x1f0] sm:$0xff]
    %v131 = vld [vmem:[#allocation4 + $0x1f8] sm:$0xff]
    %v132 = vld [vmem:[%s2] sm:$0x3]
    %v134 = vlaneseq
    %v135 = vshrl.u32 %v134, 7
    %v136 = vsub.s32 0, %v135
    %v137 = vrot.slane %v132, %v136
    %v138 = vlaneseq
    %v139 = vshrl.u32 %v138, 7
    %v140 = vsub.s32 1, %v139
    %v141 = vrot.slane %v132, %v140
    %v208 = vunpack.c.l.b16 %v68
    %v209 = vunpack.c.h.b16 %v68
    %v210 = vunpack.c.l.b16 %v69
    %v211 = vunpack.c.h.b16 %v69
    %v212 = vunpack.c.l.b16 %v70
    %v213 = vunpack.c.h.b16 %v70
    %v214 = vunpack.c.l.b16 %v71
    %v215 = vunpack.c.h.b16 %v71
    %v216 = vunpack.c.l.b16 %v72
    %v217 = vunpack.c.h.b16 %v72
    %v218 = vunpack.c.l.b16 %v73
    %v219 = vunpack.c.h.b16 %v73
    %v220 = vunpack.c.l.b16 %v74
    %v221 = vunpack.c.h.b16 %v74
    %v222 = vunpack.c.l.b16 %v75
    %v223 = vunpack.c.h.b16 %v75
    %v224 = vunpack.c.l.b16 %v76
    %v225 = vunpack.c.h.b16 %v76
    %v226 = vunpack.c.l.b16 %v77
    %v227 = vunpack.c.h.b16 %v77
    %v228 = vunpack.c.l.b16 %v78
    %v229 = vunpack.c.h.b16 %v78
    %v230 = vunpack.c.l.b16 %v79
    %v231 = vunpack.c.h.b16 %v79
    %v232 = vunpack.c.l.b16 %v80
    %v233 = vunpack.c.h.b16 %v80
    %v234 = vunpack.c.l.b16 %v81
    %v235 = vunpack.c.h.b16 %v81
    %v236 = vunpack.c.l.b16 %v82
    %v237 = vunpack.c.h.b16 %v82
    %v238 = vunpack.c.l.b16 %v83
    %v239 = vunpack.c.h.b16 %v83
    %v240 = vunpack.c.l.b16 %v84
    %v241 = vunpack.c.h.b16 %v84
    %v242 = vunpack.c.l.b16 %v85
    %v243 = vunpack.c.h.b16 %v85
    %v244 = vunpack.c.l.b16 %v86
    %v245 = vunpack.c.h.b16 %v86
    %v246 = vunpack.c.l.b16 %v87
    %v247 = vunpack.c.h.b16 %v87
    %v248 = vunpack.c.l.b16 %v88
    %v249 = vunpack.c.h.b16 %v88
    %v250 = vunpack.c.l.b16 %v89
    %v251 = vunpack.c.h.b16 %v89
    %v252 = vunpack.c.l.b16 %v90
    %v253 = vunpack.c.h.b16 %v90
    %v254 = vunpack.c.l.b16 %v91
    %v255 = vunpack.c.h.b16 %v91
    %v256 = vunpack.c.l.b16 %v92
    %v257 = vunpack.c.h.b16 %v92
    %v258 = vunpack.c.l.b16 %v93
    %v259 = vunpack.c.h.b16 %v93
    %v260 = vunpack.c.l.b16 %v94
    %v261 = vunpack.c.h.b16 %v94
    %v262 = vunpack.c.l.b16 %v95
    %v263 = vunpack.c.h.b16 %v95
    %v264 = vunpack.c.l.b16 %v96
    %v265 = vunpack.c.h.b16 %v96
    %v266 = vunpack.c.l.b16 %v97
    %v267 = vunpack.c.h.b16 %v97
    %v268 = vunpack.c.l.b16 %v98
    %v269 = vunpack.c.h.b16 %v98
    %v270 = vunpack.c.l.b16 %v99
    %v271 = vunpack.c.h.b16 %v99
    %v272 = vunpack.c.l.b16 %v100
    %v273 = vunpack.c.h.b16 %v100
    %v274 = vunpack.c.l.b16 %v101
    %v275 = vunpack.c.h.b16 %v101
    %v276 = vunpack.c.l.b16 %v102
    %v277 = vunpack.c.h.b16 %v102
    %v278 = vunpack.c.l.b16 %v103
    %v279 = vunpack.c.h.b16 %v103
    %v280 = vunpack.c.l.b16 %v104
    %v281 = vunpack.c.h.b16 %v104
    %v282 = vunpack.c.l.b16 %v105
    %v283 = vunpack.c.h.b16 %v105
    %v284 = vunpack.c.l.b16 %v106
    %v285 = vunpack.c.h.b16 %v106
    %v286 = vunpack.c.l.b16 %v107
    %v287 = vunpack.c.h.b16 %v107
    %v288 = vunpack.c.l.b16 %v108
    %v289 = vunpack.c.h.b16 %v108
    %v290 = vunpack.c.l.b16 %v109
    %v291 = vunpack.c.h.b16 %v109
    %v292 = vunpack.c.l.b16 %v110
    %v293 = vunpack.c.h.b16 %v110
    %v294 = vunpack.c.l.b16 %v111
    %v295 = vunpack.c.h.b16 %v111
    %v296 = vunpack.c.l.b16 %v112
    %v297 = vunpack.c.h.b16 %v112
    %v298 = vunpack.c.l.b16 %v113
    %v299 = vunpack.c.h.b16 %v113
    %v300 = vunpack.c.l.b16 %v114
    %v301 = vunpack.c.h.b16 %v114
    %v302 = vunpack.c.l.b16 %v115
    %v303 = vunpack.c.h.b16 %v115
    %v304 = vunpack.c.l.b16 %v116
    %v305 = vunpack.c.h.b16 %v116
    %v306 = vunpack.c.l.b16 %v117
    %v307 = vunpack.c.h.b16 %v117
    %v308 = vunpack.c.l.b16 %v118
    %v309 = vunpack.c.h.b16 %v118
    %v310 = vunpack.c.l.b16 %v119
    %v311 = vunpack.c.h.b16 %v119
    %v312 = vunpack.c.l.b16 %v120
    %v313 = vunpack.c.h.b16 %v120
    %v314 = vunpack.c.l.b16 %v121
    %v315 = vunpack.c.h.b16 %v121
    %v316 = vunpack.c.l.b16 %v122
    %v317 = vunpack.c.h.b16 %v122
    %v318 = vunpack.c.l.b16 %v123
    %v319 = vunpack.c.h.b16 %v123
    %v320 = vunpack.c.l.b16 %v124
    %v321 = vunpack.c.h.b16 %v124
    %v322 = vunpack.c.l.b16 %v125
    %v323 = vunpack.c.h.b16 %v125
    %v324 = vunpack.c.l.b16 %v126
    %v325 = vunpack.c.h.b16 %v126
    %v326 = vunpack.c.l.b16 %v127
    %v327 = vunpack.c.h.b16 %v127
    %v328 = vunpack.c.l.b16 %v128
    %v329 = vunpack.c.h.b16 %v128
    %v330 = vunpack.c.l.b16 %v129
    %v331 = vunpack.c.h.b16 %v129
    %v332 = vunpack.c.l.b16 %v130
    %v333 = vunpack.c.h.b16 %v130
    %v334 = vunpack.c.l.b16 %v131
    %v335 = vunpack.c.h.b16 %v131
    %v336 = vpack.c.b16 %v210, %v208
    %v337 = vpack.c.b16 %v211, %v209
    %v338 = vpack.c.b16 %v214, %v212
    %v339 = vpack.c.b16 %v215, %v213
    %v340 = vpack.c.b16 %v218, %v216
    %v341 = vpack.c.b16 %v219, %v217
    %v342 = vpack.c.b16 %v222, %v220
    %v343 = vpack.c.b16 %v223, %v221
    %v344 = vpack.c.b16 %v226, %v224
    %v345 = vpack.c.b16 %v227, %v225
    %v346 = vpack.c.b16 %v230, %v228
    %v347 = vpack.c.b16 %v231, %v229
    %v348 = vpack.c.b16 %v234, %v232
    %v349 = vpack.c.b16 %v235, %v233
    %v350 = vpack.c.b16 %v238, %v236
    %v351 = vpack.c.b16 %v239, %v237
    %v352 = vpack.c.b16 %v242, %v240
    %v353 = vpack.c.b16 %v243, %v241
    %v354 = vpack.c.b16 %v246, %v244
    %v355 = vpack.c.b16 %v247, %v245
    %v356 = vpack.c.b16 %v250, %v248
    %v357 = vpack.c.b16 %v251, %v249
    %v358 = vpack.c.b16 %v254, %v252
    %v359 = vpack.c.b16 %v255, %v253
    %v360 = vpack.c.b16 %v258, %v256
    %v361 = vpack.c.b16 %v259, %v257
    %v362 = vpack.c.b16 %v262, %v260
    %v363 = vpack.c.b16 %v263, %v261
    %v364 = vpack.c.b16 %v266, %v264
    %v365 = vpack.c.b16 %v267, %v265
    %v366 = vpack.c.b16 %v270, %v268
    %v367 = vpack.c.b16 %v271, %v269
    %v368 = vpack.c.b16 %v274, %v272
    %v369 = vpack.c.b16 %v275, %v273
    %v370 = vpack.c.b16 %v278, %v276
    %v371 = vpack.c.b16 %v279, %v277
    %v372 = vpack.c.b16 %v282, %v280
    %v373 = vpack.c.b16 %v283, %v281
    %v374 = vpack.c.b16 %v286, %v284
    %v375 = vpack.c.b16 %v287, %v285
    %v376 = vpack.c.b16 %v290, %v288
    %v377 = vpack.c.b16 %v291, %v289
    %v378 = vpack.c.b16 %v294, %v292
    %v379 = vpack.c.b16 %v295, %v293
    %v380 = vpack.c.b16 %v298, %v296
    %v381 = vpack.c.b16 %v299, %v297
    %v382 = vpack.c.b16 %v302, %v300
    %v383 = vpack.c.b16 %v303, %v301
    %v384 = vpack.c.b16 %v306, %v304
    %v385 = vpack.c.b16 %v307, %v305
    %v386 = vpack.c.b16 %v310, %v308
    %v387 = vpack.c.b16 %v311, %v309
    %v388 = vpack.c.b16 %v314, %v312
    %v389 = vpack.c.b16 %v315, %v313
    %v390 = vpack.c.b16 %v318, %v316
    %v391 = vpack.c.b16 %v319, %v317
    %v392 = vpack.c.b16 %v322, %v320
    %v393 = vpack.c.b16 %v323, %v321
    %v394 = vpack.c.b16 %v326, %v324
    %v395 = vpack.c.b16 %v327, %v325
    %v396 = vpack.c.b16 %v330, %v328
    %v397 = vpack.c.b16 %v331, %v329
    %v398 = vpack.c.b16 %v334, %v332
    %v399 = vpack.c.b16 %v335, %v333
    %464 = vmatprep.subr.bf16.mxu0 %v337
    %465 = vmatpush1.bf16.msra.mxu0 %v336
    %466 = vmatprep.subr.bf16.mxu0 %v339
    %467 = vmatpush1.bf16.msra.mxu0 %v338
    %468 = vmatprep.subr.bf16.mxu0 %v341
    %469 = vmatpush1.bf16.msra.mxu0 %v340
    %470 = vmatprep.subr.bf16.mxu0 %v343
    %471 = vmatpush1.bf16.msra.mxu0 %v342
    %472 = vmatprep.subr.bf16.mxu0 %v345
    %473 = vmatpush1.bf16.msra.mxu0 %v344
    %474 = vmatprep.subr.bf16.mxu0 %v347
    %475 = vmatpush1.bf16.msra.mxu0 %v346
    %476 = vmatprep.subr.bf16.mxu0 %v349
    %477 = vmatpush1.bf16.msra.mxu0 %v348
    %478 = vmatprep.subr.bf16.mxu0 %v351
    %479 = vmatpush1.bf16.msra.mxu0 %v350
    %480 = vmatprep.subr.bf16.mxu0 %v353
    %481 = vmatpush1.bf16.msra.mxu0 %v352
    %482 = vmatprep.subr.bf16.mxu0 %v355
    %483 = vmatpush1.bf16.msra.mxu0 %v354
    %484 = vmatprep.subr.bf16.mxu0 %v357
    %485 = vmatpush1.bf16.msra.mxu0 %v356
    %486 = vmatprep.subr.bf16.mxu0 %v359
    %487 = vmatpush1.bf16.msra.mxu0 %v358
    %488 = vmatprep.subr.bf16.mxu0 %v361
    %489 = vmatpush1.bf16.msra.mxu0 %v360
    %490 = vmatprep.subr.bf16.mxu0 %v363
    %491 = vmatpush1.bf16.msra.mxu0 %v362
    %492 = vmatprep.subr.bf16.mxu0 %v365
    %493 = vmatpush1.bf16.msra.mxu0 %v364
    %494 = vmatprep.subr.bf16.mxu0 %v367
    %495 = vmatpush1.bf16.msra.mxu0 %v366
    %496 = vmatprep.mubr.bf16.mxu0 %v65
    %497 = vmatmul.mubr.bf16.gmra.mrb[0].mxu0 %v64
    %v498 = vpop.f32.mrb[0].mxu0
    %v499 = vadd.f32 %v137, %v498
    %v500 = vpop.f32.mrb[0].mxu0
    %v501 = vadd.f32 %v141, %v500
    %v502 = vpop.f32.mrb[0].mxu0
    %v503 = vpop.f32.mrb[0].mxu0
    %504 = vdwg.mxu0
    %505 = vmatprep.subr.bf16.mxu0 %v369
    %506 = vmatpush1.bf16.msra.mxu0 %v368
    %507 = vmatprep.subr.bf16.mxu0 %v371
    %508 = vmatpush1.bf16.msra.mxu0 %v370
    %509 = vmatprep.subr.bf16.mxu0 %v373
    %510 = vmatpush1.bf16.msra.mxu0 %v372
    %511 = vmatprep.subr.bf16.mxu0 %v375
    %512 = vmatpush1.bf16.msra.mxu0 %v374
    %513 = vmatprep.subr.bf16.mxu0 %v377
    %514 = vmatpush1.bf16.msra.mxu0 %v376
    %515 = vmatprep.subr.bf16.mxu0 %v379
    %516 = vmatpush1.bf16.msra.mxu0 %v378
    %517 = vmatprep.subr.bf16.mxu0 %v381
    %518 = vmatpush1.bf16.msra.mxu0 %v380
    %519 = vmatprep.subr.bf16.mxu0 %v383
    %520 = vmatpush1.bf16.msra.mxu0 %v382
    %521 = vmatprep.subr.bf16.mxu0 %v385
    %522 = vmatpush1.bf16.msra.mxu0 %v384
    %523 = vmatprep.subr.bf16.mxu0 %v387
    %524 = vmatpush1.bf16.msra.mxu0 %v386
    %525 = vmatprep.subr.bf16.mxu0 %v389
    %526 = vmatpush1.bf16.msra.mxu0 %v388
    %527 = vmatprep.subr.bf16.mxu0 %v391
    %528 = vmatpush1.bf16.msra.mxu0 %v390
    %529 = vmatprep.subr.bf16.mxu0 %v393
    %530 = vmatpush1.bf16.msra.mxu0 %v392
    %531 = vmatprep.subr.bf16.mxu0 %v395
    %532 = vmatpush1.bf16.msra.mxu0 %v394
    %533 = vmatprep.subr.bf16.mxu0 %v397
    %534 = vmatpush1.bf16.msra.mxu0 %v396
    %535 = vmatprep.subr.bf16.mxu0 %v399
    %536 = vmatpush1.bf16.msra.mxu0 %v398
    %537 = vmatprep.mubr.bf16.mxu0 %v67
    %538 = vmatmul.mubr.bf16.gmra.mrb[0].mxu0 %v66
    %v539 = vpop.f32.mrb[0].mxu0
    %v540 = vadd.f32 %v499, %v539
    %v541 = vpop.f32.mrb[0].mxu0
    %v542 = vadd.f32 %v501, %v541
    %v543 = vpop.f32.mrb[0].mxu0
    %v544 = vpop.f32.mrb[0].mxu0
    %545 = vdwg.mxu0
    %v546 = vmax.f32 %v540, 0.0
    %v547 = vmax.f32 %v542, 0.0
    %v548 = vpack.c.bf16 %v546, %v546
    %v549 = vpack.c.bf16 %v547, %v547
    %v550 = vld [vmem:[#allocation6] sm:$0xf]
    %v551 = vld [vmem:[#allocation6 + $0x4] sm:$0xf]
    %v552 = vld [vmem:[#allocation6 + $0x8] sm:$0xf]
    %v553 = vld [vmem:[#allocation6 + $0xc] sm:$0xf]
    %v554 = vld [vmem:[#allocation6 + $0x10] sm:$0xf]
    %v555 = vld [vmem:[#allocation6 + $0x14] sm:$0xf]
    %v556 = vld [vmem:[#allocation6 + $0x18] sm:$0xf]
    %v557 = vld [vmem:[#allocation6 + $0x1c] sm:$0xf]
    %v558 = vld [vmem:[#allocation6 + $0x20] sm:$0xf]
    %v559 = vld [vmem:[#allocation6 + $0x24] sm:$0xf]
    %v560 = vld [vmem:[#allocation6 + $0x28] sm:$0xf]
    %v561 = vld [vmem:[#allocation6 + $0x2c] sm:$0xf]
    %v562 = vld [vmem:[#allocation6 + $0x30] sm:$0xf]
    %v563 = vld [vmem:[#allocation6 + $0x34] sm:$0xf]
    %v564 = vld [vmem:[#allocation6 + $0x38] sm:$0xf]
    %v565 = vld [vmem:[#allocation6 + $0x3c] sm:$0xf]
    %v566 = vld [vmem:[#allocation6 + $0x40] sm:$0xf]
    %v567 = vld [vmem:[#allocation6 + $0x44] sm:$0xf]
    %v568 = vld [vmem:[#allocation6 + $0x48] sm:$0xf]
    %v569 = vld [vmem:[#allocation6 + $0x4c] sm:$0xf]
    %v570 = vld [vmem:[#allocation6 + $0x50] sm:$0xf]
    %v571 = vld [vmem:[#allocation6 + $0x54] sm:$0xf]
    %v572 = vld [vmem:[#allocation6 + $0x58] sm:$0xf]
    %v573 = vld [vmem:[#allocation6 + $0x5c] sm:$0xf]
    %v574 = vld [vmem:[#allocation6 + $0x60] sm:$0xf]
    %v575 = vld [vmem:[#allocation6 + $0x64] sm:$0xf]
    %v576 = vld [vmem:[#allocation6 + $0x68] sm:$0xf]
    %v577 = vld [vmem:[#allocation6 + $0x6c] sm:$0xf]
    %v578 = vld [vmem:[#allocation6 + $0x70] sm:$0xf]
    %v579 = vld [vmem:[#allocation6 + $0x74] sm:$0xf]
    %v580 = vld [vmem:[#allocation6 + $0x78] sm:$0xf]
    %v581 = vld [vmem:[#allocation6 + $0x7c] sm:$0xf]
    %v582 = vld [vmem:[%s4] sm:$0x1]
    %v584 = vlaneseq
    %v585 = vshrl.u32 %v584, 7
    %v586 = vsub.s32 0, %v585
    %v587 = vrot.slane %v582, %v586
    %v621 = vunpack.c.l.b16 %v550
    %v622 = vunpack.c.l.b16 %v551
    %v623 = vunpack.c.l.b16 %v552
    %v624 = vunpack.c.l.b16 %v553
    %v625 = vunpack.c.l.b16 %v554
    %v626 = vunpack.c.l.b16 %v555
    %v627 = vunpack.c.l.b16 %v556
    %v628 = vunpack.c.l.b16 %v557
    %v629 = vunpack.c.l.b16 %v558
    %v630 = vunpack.c.l.b16 %v559
    %v631 = vunpack.c.l.b16 %v560
    %v632 = vunpack.c.l.b16 %v561
    %v633 = vunpack.c.l.b16 %v562
    %v634 = vunpack.c.l.b16 %v563
    %v635 = vunpack.c.l.b16 %v564
    %v636 = vunpack.c.l.b16 %v565
    %v637 = vunpack.c.l.b16 %v566
    %v638 = vunpack.c.l.b16 %v567
    %v639 = vunpack.c.l.b16 %v568
    %v640 = vunpack.c.l.b16 %v569
    %v641 = vunpack.c.l.b16 %v570
    %v642 = vunpack.c.l.b16 %v571
    %v643 = vunpack.c.l.b16 %v572
    %v644 = vunpack.c.l.b16 %v573
    %v645 = vunpack.c.l.b16 %v574
    %v646 = vunpack.c.l.b16 %v575
    %v647 = vunpack.c.l.b16 %v576
    %v648 = vunpack.c.l.b16 %v577
    %v649 = vunpack.c.l.b16 %v578
    %v650 = vunpack.c.l.b16 %v579
    %v651 = vunpack.c.l.b16 %v580
    %v652 = vunpack.c.l.b16 %v581
    %v653 = vpack.c.b16 %v622, %v621
    %v654 = vpack.c.b16 %v624, %v623
    %v655 = vpack.c.b16 %v626, %v625
    %v656 = vpack.c.b16 %v628, %v627
    %v657 = vpack.c.b16 %v630, %v629
    %v658 = vpack.c.b16 %v632, %v631
    %v659 = vpack.c.b16 %v634, %v633
    %v660 = vpack.c.b16 %v636, %v635
    %v661 = vpack.c.b16 %v638, %v637
    %v662 = vpack.c.b16 %v640, %v639
    %v663 = vpack.c.b16 %v642, %v641
    %v664 = vpack.c.b16 %v644, %v643
    %v665 = vpack.c.b16 %v646, %v645
    %v666 = vpack.c.b16 %v648, %v647
    %v667 = vpack.c.b16 %v650, %v649
    %v668 = vpack.c.b16 %v652, %v651
    %685 = vmatprep.subr.bf16.mxu0 0
    %686 = vmatpush1.bf16.msra.mxu0 %v653
    %687 = vmatprep.subr.bf16.mxu0 0
    %688 = vmatpush1.bf16.msra.mxu0 %v654
    %689 = vmatprep.subr.bf16.mxu0 0
    %690 = vmatpush1.bf16.msra.mxu0 %v655
    %691 = vmatprep.subr.bf16.mxu0 0
    %692 = vmatpush1.bf16.msra.mxu0 %v656
    %693 = vmatprep.subr.bf16.mxu0 0
    %694 = vmatpush1.bf16.msra.mxu0 %v657
    %695 = vmatprep.subr.bf16.mxu0 0
    %696 = vmatpush1.bf16.msra.mxu0 %v658
    %697 = vmatprep.subr.bf16.mxu0 0
    %698 = vmatpush1.bf16.msra.mxu0 %v659
    %699 = vmatprep.subr.bf16.mxu0 0
    %700 = vmatpush1.bf16.msra.mxu0 %v660
    %701 = vmatprep.subr.bf16.mxu0 0
    %702 = vmatpush1.bf16.msra.mxu0 %v661
    %703 = vmatprep.subr.bf16.mxu0 0
    %704 = vmatpush1.bf16.msra.mxu0 %v662
    %705 = vmatprep.subr.bf16.mxu0 0
    %706 = vmatpush1.bf16.msra.mxu0 %v663
    %707 = vmatprep.subr.bf16.mxu0 0
    %708 = vmatpush1.bf16.msra.mxu0 %v664
    %709 = vmatprep.subr.bf16.mxu0 0
    %710 = vmatpush1.bf16.msra.mxu0 %v665
    %711 = vmatprep.subr.bf16.mxu0 0
    %712 = vmatpush1.bf16.msra.mxu0 %v666
    %713 = vmatprep.subr.bf16.mxu0 0
    %714 = vmatpush1.bf16.msra.mxu0 %v667
    %715 = vmatprep.subr.bf16.mxu0 0
    %716 = vmatpush1.bf16.msra.mxu0 %v668
    %717 = vmatprep.mubr.bf16.mxu0 %v549
    %718 = vmatmul.mubr.bf16.gmra.mrb[0].mxu0 %v548
    %v719 = vpop.f32.mrb[0].mxu0
    %v720 = vadd.f32 %v587, %v719
    %v721 = vpop.f32.mrb[0].mxu0
    %v722 = vpop.f32.mrb[0].mxu0
    %v723 = vpop.f32.mrb[0].mxu0
    %724 = vdwg.mxu0
    %v725 = vpack.c.bf16 %v720, %v720
    %726 = vst [vmem:[%s5] sm:$0xf] %v725
    // Predicated region
    $region34: #{bbox_regressor.1} parent=1 // pred_check
      _
    $region35: #{bbox_regressor.1} parent=1 // pred_check_branch
      %728 = sbr.rel (0) target = $region37
    $region36: #{bbox_regressor.1} parent=1 // pred_region
      _
    $region37: #{bbox_regressor.1} parent=1 // pred_fallthru
      _
    // Predicated region
    $region38: #{bbox_regressor.1} parent=1 // pred_check
      _
    $region39: #{bbox_regressor.1} parent=1 // pred_check_branch
      %730 = sbr.rel (0) target = $region41
    $region40: #{bbox_regressor.1} parent=1 // pred_region
      _
    $region41: #{bbox_regressor.1} parent=1 // pred_fallthru
      _
    %731 = vsyncpa [#allocation3], 1
    %732 = vsyncpa [#allocation5], 1

</llo_original>
